<compile_context>
chip_gen: v5e
topology: v5e:2x2
jax: 0.10.0
libtpu: 0.0.40
codegen_flags: <defaults>
</compile_context>

<pallas_src>
import jax
import jax.numpy as jnp
from jax.experimental import pallas as pl
from jax.experimental.pallas import tpu as pltpu

LATENT = 10
C, H, W = 4, 8, 8
OUT = C * H * W  # 256

# Default batch tile: ~2.2 MiB of double-buffered VMEM per step, fits the
# default scoped VMEM limit on every generation (v5e/v6e/v7x).
MAX_TB = 1024


def _decoder_kernel(x_ref, w_ref, b_ref, o_ref):
    # Hot path: MXU matmul + bias add (VPU) + tanh (EUP), all hidden under DMA.
    y = jnp.dot(x_ref[...], w_ref[...], preferred_element_type=jnp.float32)
    o_ref[...] = jnp.tanh(y + b_ref[...])


def cifar10_decoder2(x, weight, bias, *, max_tb: int = MAX_TB):
    """x: (B, LATENT) f32 -> (B, C, H, W) f32."""
    B = x.shape[0]

    # Pick the batch tile: multiple of 8 (sublane), capped at max_tb.
    TB = min(max_tb, max(8, ((B + 7) // 8) * 8))
    Bp = pl.cdiv(B, TB) * TB

    x_p = x if Bp == B else jnp.pad(x, ((0, Bp - B), (0, 0)))
    bias2d = bias.reshape(1, OUT)

    grid = (Bp // TB,)

    cost = pl.CostEstimate(
        flops=2 * Bp * LATENT * OUT,
        transcendentals=Bp * OUT,
        bytes_accessed=Bp * (LATENT + OUT) * 4 + (LATENT * OUT + OUT) * 4,
    )

    flat = pl.pallas_call(
        _decoder_kernel,
        out_shape=jax.ShapeDtypeStruct((Bp, OUT), jnp.float32),
        grid_spec=pltpu.PrefetchScalarGridSpec(
            num_scalar_prefetch=0,
            grid=grid,
            in_specs=[
                pl.BlockSpec((TB, LATENT), lambda i: (i, 0)),   # batch-tiled x
                pl.BlockSpec((LATENT, OUT), lambda i: (0, 0)),  # resident weight
                pl.BlockSpec((1, OUT), lambda i: (0, 0)),       # resident bias
            ],
            out_specs=pl.BlockSpec((TB, OUT), lambda i: (i, 0)),
        ),
        compiler_params=pltpu.CompilerParams(
            dimension_semantics=("parallel",),
        ),
        cost_estimate=cost,
    )(x_p, weight, bias2d)

    # Drop batch padding, then Unflatten(-1, (C, H, W)) — pure layout glue.
    return flat[:B].reshape(B, C, H, W)


def _reference(x, weight, bias):
    return jnp.tanh(x @ weight + bias[None, :]).reshape(x.shape[0], C, H, W)


if __name__ == "__main__":
    key = jax.random.PRNGKey(0)
    kx, kw, kb = jax.random.split(key, 3)

    B = 2
    x = jax.random.normal(kx, (B, LATENT), dtype=jnp.float32)

    # Deterministic Linear init (matches torch's uniform(-1/sqrt(fan_in), ...)).
    bound = 1.0 / (LATENT ** 0.5)
    weight = jax.random.uniform(kw, (LATENT, OUT), jnp.float32, -bound, bound)
    bias = jax.random.uniform(kb, (OUT,), jnp.float32, -bound, bound)

    out = jax.block_until_ready(cifar10_decoder2(x, weight, bias))

    ref = _reference(x, weight, bias)
    assert out.shape == (B, C, H, W), out.shape
    assert jnp.allclose(out, ref, atol=1e-5, rtol=1e-5)

    print("KERNEL_OK")
</pallas_src>

<mosaic_0001>
module attributes {stable_mosaic.version = 11 : i64} {
  func.func @_decoder_kernel(%arg0: i32, %arg1: memref<8x10xf32, #tpu.memory_space<vmem>>, %arg2: memref<10x256xf32, #tpu.memory_space<vmem>>, %arg3: memref<1x256xf32, #tpu.memory_space<vmem>>, %arg4: memref<8x256xf32, #tpu.memory_space<vmem>>) attributes {dimension_semantics = [#tpu.dimension_semantics<parallel>], iteration_bounds = array<i64: 1>, scalar_prefetch = 0 : i64, scratch_operands = 0 : i64, tpu.core_type = #tpu.core_type<tc>, window_params = [{transform_indices = @transform_0, window_bounds = array<i64: 8, 10>}, {pipeline_mode = #tpu.pipeline_mode<synchronous>, transform_indices = @transform_1, window_bounds = array<i64: 10, 256>}, {pipeline_mode = #tpu.pipeline_mode<synchronous>, transform_indices = @transform_2, window_bounds = array<i64: 1, 256>}, {transform_indices = @transform_3, window_bounds = array<i64: 8, 256>}]} {
    %c0 = arith.constant 0 : index
    %c0_0 = arith.constant 0 : index
    %0 = vector.load %arg1[%c0, %c0_0] : memref<8x10xf32, #tpu.memory_space<vmem>>, vector<8x10xf32>
    %c0_1 = arith.constant 0 : index
    %c0_2 = arith.constant 0 : index
    %1 = vector.load %arg2[%c0_1, %c0_2] : memref<10x256xf32, #tpu.memory_space<vmem>>, vector<10x256xf32>
    %cst = arith.constant dense<0.000000e+00> : vector<8x256xf32>
    %2 = tpu.matmul %0, %1, %cst {dimension_numbers = #tpu.dot_dimension_numbers<[1], [0], [0], [1], [0, 0, 1, 1], [], []>} : vector<8x10xf32>, vector<10x256xf32>, vector<8x256xf32> -> vector<8x256xf32>
    %c0_3 = arith.constant 0 : index
    %c0_4 = arith.constant 0 : index
    %3 = vector.load %arg3[%c0_3, %c0_4] : memref<1x256xf32, #tpu.memory_space<vmem>>, vector<1x256xf32>
    %4 = vector.broadcast %3 : vector<1x256xf32> to vector<8x256xf32>
    %5 = arith.addf %2, %4 : vector<8x256xf32>
    %6 = math.tanh %5 : vector<8x256xf32>
    %c0_5 = arith.constant 0 : index
    %c0_6 = arith.constant 0 : index
    %7 = vector.load %arg4[%c0_5, %c0_6] : memref<8x256xf32, #tpu.memory_space<vmem>>, vector<8x256xf32>
    tpu.vector_store %arg4[%c0_5, %c0_6], %6 {strides = array<i32>} : memref<8x256xf32, #tpu.memory_space<vmem>>, vector<8x256xf32>,
    return
  }
  func.func @transform_0(%arg0: i32) -> (i32, i32) {
    %c0_i32 = arith.constant 0 : i32
    %c0_i32_0 = arith.constant 0 : i32
    return %arg0, %c0_i32 : i32, i32
  }
  func.func @transform_1(%arg0: i32) -> (i32, i32) {
    %c0_i32 = arith.constant 0 : i32
    %c0_i32_0 = arith.constant 0 : i32
    %c0_i32_1 = arith.constant 0 : i32
    return %c0_i32, %c0_i32_0 : i32, i32
  }
  func.func @transform_2(%arg0: i32) -> (i32, i32) {
    %c0_i32 = arith.constant 0 : i32
    %c0_i32_0 = arith.constant 0 : i32
    %c0_i32_1 = arith.constant 0 : i32
    return %c0_i32, %c0_i32_0 : i32, i32
  }
  func.func @transform_3(%arg0: i32) -> (i32, i32) {
    %c0_i32 = arith.constant 0 : i32
    %c0_i32_0 = arith.constant 0 : i32
    return %arg0, %c0_i32 : i32, i32
  }
}

</mosaic_0001>

<llo_original>
// kernel: tpu_custom_call.1
$region0: #{tpu_custom_call.1}
  #allocation0 [shape = 'u32[]', space=smem, size = 0x4, offset = 0x4, fixed_abs, tag = 'smem constant byte address 0x4 - core index']
  #allocation1 [shape = 'u32[72,128]{1,0:T(1,128)}', space=vmem, size = 0x9000, scoped, tag = 'internal scratch']
  %s0 = inlined_call_operand.hbm [shape: f32[8,10], index: 0, kind: input, shape index: {}]
  %s1 = inlined_call_operand.hbm [shape: f32[10,256], index: 1, kind: input, shape index: {}]
  %s2 = inlined_call_operand.hbm [shape: f32[1,256], index: 2, kind: input, shape index: {}]
  %s3 = inlined_call_operand.hbm [shape: f32[8,256], index: 3, kind: output, shape index: {}]
  %s4 = sld [smem:[#allocation0]]
  $region34: #{tpu_custom_call.1} parent=0
    _
  %s6 = ssub.s32 1, %s4
  %s7 = scalar_select 0, %s6, %s4
  $region1: #{tpu_custom_call.1} parent=0
    #allocation2 [shape = 'u8[4096]{0}', space=vmem, size = 0x1000, scoped, tag = 'input window, operand 0, single buffered']
    #allocation3 [shape = 's32[1]{0}', space=sflag, size = 0x4, scoped, tag = 'scoped memory for tpu_custom_call.1']
    #allocation4 [shape = 's32[1]{0}', space=sflag, size = 0x4, scoped, tag = 'scoped memory for tpu_custom_call.1']
    #allocation5 [shape = 'u8[16384]{0}', space=vmem, size = 0x4000, scoped, tag = 'input window, operand 1, single buffered']
    #allocation6 [shape = 's32[1]{0}', space=sflag, size = 0x4, scoped, tag = 'scoped memory for tpu_custom_call.1']
    #allocation7 [shape = 'u8[1024]{0}', space=vmem, size = 0x400, scoped, tag = 'input window, operand 2, single buffered']
    #allocation8 [shape = 'u8[8192]{0}', space=vmem, size = 0x2000, scoped, tag = 'output window, operand 0, single buffered']
    %8 = vsyncpa [#allocation3], 0
    %9 = vsyncpa [#allocation6], 0
    %10 = vsyncpa [#allocation4], 0
    // Predicated region
    $region2: #{tpu_custom_call.1} parent=1 // pred_check
      _
    $region3: #{tpu_custom_call.1} parent=1 // pred_check_branch
      %12 = sbr.rel (0) target = $region5
    $region4: #{tpu_custom_call.1} parent=1 // pred_region
      %14 = vsyncadd [#allocation3], 0
      %s16 = sshll.u32 %s0, 4
      %s17 = int_to_ptr.hbm [resolvable:$true] %s16
      %s18 = sshll.u32 [#allocation2], 4
      %s19 = int_to_ptr.vmem [resolvable:$true] %s18
      %21 = dma.hbm_to_vmem [thread:$0]  %s17, 128, %s19, [#allocation3]
    $region5: #{tpu_custom_call.1} parent=1 // pred_fallthru
      _
    // Predicated region
    $region6: #{tpu_custom_call.1} parent=1 // pred_check
      _
    $region7: #{tpu_custom_call.1} parent=1 // pred_check_branch
      %23 = sbr.rel (0) target = $region9
    $region8: #{tpu_custom_call.1} parent=1 // pred_region
      %25 = vsyncadd [#allocation6], 0
      %s26 = sshll.u32 %s1, 4
      %s27 = int_to_ptr.hbm [resolvable:$true] %s26
      %s28 = sshll.u32 [#allocation5], 4
      %s29 = int_to_ptr.vmem [resolvable:$true] %s28
      %34 = dma.hbm_to_vmem [thread:$0]  %s27, 512, %s29, [#allocation6], 256, 256, 16
    $region9: #{tpu_custom_call.1} parent=1 // pred_fallthru
      _
    // Predicated region
    $region10: #{tpu_custom_call.1} parent=1 // pred_check
      _
    $region11: #{tpu_custom_call.1} parent=1 // pred_check_branch
      %36 = sbr.rel (0) target = $region13
    $region12: #{tpu_custom_call.1} parent=1 // pred_region
      %38 = vsyncadd [#allocation6], 0
      %s40 = sshll.u32 %s2, 4
      %s41 = int_to_ptr.hbm [resolvable:$true] %s40
      %s42 = sshll.u32 [#allocation7], 4
      %s43 = int_to_ptr.vmem [resolvable:$true] %s42
      %45 = dma.hbm_to_vmem [thread:$0]  %s41, 32, %s43, [#allocation6]
    $region13: #{tpu_custom_call.1} parent=1 // pred_fallthru
      _
    // Predicated region
    $region14: #{tpu_custom_call.1} parent=1 // pred_check
      _
    $region15: #{tpu_custom_call.1} parent=1 // pred_check_branch
      %47 = sbr.rel (0) target = $region17
    $region16: #{tpu_custom_call.1} parent=1 // pred_region
      %49 = dma.done [#allocation3], 128
    $region17: #{tpu_custom_call.1} parent=1 // pred_fallthru
      _
    // Predicated region
    $region18: #{tpu_custom_call.1} parent=1 // pred_check
      _
    $region19: #{tpu_custom_call.1} parent=1 // pred_check_branch
      %51 = sbr.rel (0) target = $region21
    $region20: #{tpu_custom_call.1} parent=1 // pred_region
      %53 = dma.done [#allocation6], 512
    $region21: #{tpu_custom_call.1} parent=1 // pred_fallthru
      _
    // Predicated region
    $region22: #{tpu_custom_call.1} parent=1 // pred_check
      _
    $region23: #{tpu_custom_call.1} parent=1 // pred_check_branch
      %55 = sbr.rel (0) target = $region25
    $region24: #{tpu_custom_call.1} parent=1 // pred_region
      %57 = dma.done [#allocation6], 32
    $region25: #{tpu_custom_call.1} parent=1 // pred_fallthru
      _
    %v58 = vld [vmem:[#allocation2] sm:$0xff]
    %v59 = vld [vmem:[#allocation5] sm:$0xff]
    %v60 = vld [vmem:[#allocation5 + $0x8] sm:$0xff]
    %v61 = vld [vmem:[#allocation5 + $0x10] sm:$0x3]
    %v62 = vld [vmem:[#allocation5 + $0x18] sm:$0x3]
    %v63 = vld [vmem:[#allocation7] sm:$0x3]
    %v65 = vperm.slane %v63, 0
    %v66 = vperm.slane %v63, 1
    %vm69 = vcmask 80896
    %v71 = vsel %vm69, %v58, 0
    %vm73 = vcmask 1041408
    %v75 = vsel %vm73, %v61, 0
    %v78 = vsel %vm73, %v62, 0
    %80 = vmatpush.msra.mxu0 0.0
    %81 = vmatpush.msra.mxu0 0.0
    %82 = vmatpush.msra.mxu0 0.0
    %83 = vmatpush.msra.mxu0 0.0
    %84 = vmatpush.msra.mxu0 0.0
    %85 = vmatpush.msra.mxu0 0.0
    %86 = vmatpush.msra.mxu0 0.0
    %87 = vmatpush.msra.mxu0 0.0
    %88 = vmatpush.msra.mxu0 0.0
    %89 = vmatpush.msra.mxu0 0.0
    %90 = vmatpush.msra.mxu0 0.0
    %91 = vmatpush.msra.mxu0 0.0
    %92 = vmatpush.msra.mxu0 0.0
    %93 = vmatpush.msra.mxu0 0.0
    %94 = vmatpush.msra.mxu0 %v75
    %95 = vmatpush.msra.mxu0 %v59
    %96 = vmatmul.f32.gmra.mxu0 %v71
    %v97 = vpop.f32.mrf.mxu0
    %v98 = vadd.f32 %v65, %v97
    %99 = vdwg.mxu0
    %100 = vmatpush.msra.mxu0 0.0
    %101 = vmatpush.msra.mxu0 0.0
    %102 = vmatpush.msra.mxu0 0.0
    %103 = vmatpush.msra.mxu0 0.0
    %104 = vmatpush.msra.mxu0 0.0
    %105 = vmatpush.msra.mxu0 0.0
    %106 = vmatpush.msra.mxu0 0.0
    %107 = vmatpush.msra.mxu0 0.0
    %108 = vmatpush.msra.mxu0 0.0
    %109 = vmatpush.msra.mxu0 0.0
    %110 = vmatpush.msra.mxu0 0.0
    %111 = vmatpush.msra.mxu0 0.0
    %112 = vmatpush.msra.mxu0 0.0
    %113 = vmatpush.msra.mxu0 0.0
    %114 = vmatpush.msra.mxu0 %v78
    %115 = vmatpush.msra.mxu0 %v60
    %116 = vmatmul.f32.gmra.mxu0 %v71
    %v117 = vpop.f32.mrf.mxu0
    %v118 = vadd.f32 %v66, %v117
    %119 = vdwg.mxu0
    %v120 = vtanh.pop %v98
    %v121 = vtanh.pop %v118
    %122 = vst [vmem:[#allocation8] sm:$0xff] %v120
    %123 = vst [vmem:[#allocation8 + $0x8] sm:$0xff] %v121
    // Predicated region
    $region26: #{tpu_custom_call.1} parent=1 // pred_check
      _
    $region27: #{tpu_custom_call.1} parent=1 // pred_check_branch
      %125 = sbr.rel (0) target = $region29
    $region28: #{tpu_custom_call.1} parent=1 // pred_region
      %127 = vsyncadd [#allocation4], 0
      %s129 = sshll.u32 [#allocation8], 4
      %s130 = int_to_ptr.vmem [resolvable:$true] %s129
      %s131 = sshll.u32 %s3, 4
      %s132 = int_to_ptr.hbm [resolvable:$true] %s131
      %134 = dma.vmem_to_hbm [thread:$0]  %s130, 256, %s132, [#allocation4]
    $region29: #{tpu_custom_call.1} parent=1 // pred_fallthru
      _
    // Predicated region
    $region30: #{tpu_custom_call.1} parent=1 // pred_check
      _
    $region31: #{tpu_custom_call.1} parent=1 // pred_check_branch
      %136 = sbr.rel (0) target = $region33
    $region32: #{tpu_custom_call.1} parent=1 // pred_region
      %138 = dma.done [#allocation4], 256
    $region33: #{tpu_custom_call.1} parent=1 // pred_fallthru
      _
    %139 = vsyncpa [#allocation3], 1
    %140 = vsyncpa [#allocation6], 1
    %141 = vsyncpa [#allocation4], 1

</llo_original>
